<compile_context>
chip_gen: v7x
topology: tpu7x:2x2x1
jax: 0.10.0
libtpu: 0.0.40
codegen_flags: <defaults>
</compile_context>

<pallas_src>
import functools

import numpy as np
import jax
import jax.numpy as jnp
from jax.experimental import pallas as pl
from jax.experimental.pallas import tpu as pltpu


# ---------------------------------------------------------------------------
# 1-D interpolation weight matrices (host-side, cached across calls).
# ---------------------------------------------------------------------------
def _interp_matrix_np(out_size: int, in_size: int, align_corners: bool) -> np.ndarray:
    """(out_size, in_size) linear interpolation matrix matching PyTorch's
    F.interpolate coordinate convention (built in f32)."""
    i = np.arange(out_size, dtype=np.float32)
    if align_corners:
        if out_size == 1:
            src = np.zeros((out_size,), dtype=np.float32)
        else:
            src = i * (float(in_size - 1) / float(out_size - 1))
    else:
        src = (i + 0.5) * (float(in_size) / float(out_size)) - 0.5
        # PyTorch clamps negative source coords to 0; clamping the upper end to
        # in_size-1 yields identical weights (both neighbors collapse to in-1).
        src = np.clip(src, 0.0, float(in_size - 1))
    i0 = np.floor(src).astype(np.int64)
    i1 = np.minimum(i0 + 1, in_size - 1)
    w1 = (src - i0).astype(np.float32)
    w0 = (1.0 - w1).astype(np.float32)
    W = np.zeros((out_size, in_size), dtype=np.float32)
    rows = np.arange(out_size)
    np.add.at(W, (rows, i0), w0)
    np.add.at(W, (rows, i1), w1)
    return W


@functools.lru_cache(maxsize=None)
def _cached_weights(h_in, w_in, h_out, w_out, align_corners, dtype_name):
    dtype = jnp.dtype(dtype_name)
    wh = jnp.asarray(_interp_matrix_np(h_out, h_in, align_corners), dtype=dtype)
    wwt = jnp.asarray(_interp_matrix_np(w_out, w_in, align_corners).T, dtype=dtype)
    return wh, wwt


# ---------------------------------------------------------------------------
# Kernel.
# ---------------------------------------------------------------------------
def _bilinear_kernel(x_ref, wh_ref, wwt_ref, o_ref):
    # x_ref:   (B, H_in,  W_in)   -- B planes per grid step
    # wh_ref:  (H_out, H_in)
    # wwt_ref: (W_in,  W_out)     -- pre-transposed W_w
    # o_ref:   (B, H_out, W_out)
    b, h_in, w_in = x_ref.shape
    h_out = wh_ref.shape[0]
    w_out = wwt_ref.shape[1]

    x = x_ref[...]

    # W-interp: one flat MXU matmul with the plane batch folded into M.
    t = jnp.dot(x.reshape(b * h_in, w_in), wwt_ref[...],
                preferred_element_type=jnp.float32)            # (B*H_in, W_out)
    t = t.astype(x.dtype).reshape(b, h_in, w_out)               # sublane-only split

    # H-interp: batched MXU matmul.  The Wh broadcast is materialized because
    # the batched 'boh,bhw->bow' contraction is the form known to lower on
    # Mosaic; its VMEM footprint is charged in the wrapper's block budget.
    # TODO(synk): replace with an unbroadcast contraction once verified on HW.
    wh_b = jnp.broadcast_to(wh_ref[...], (b, h_out, h_in))
    out = jnp.einsum('boh,bhw->bow', wh_b, t,
                     preferred_element_type=jnp.float32)        # (B, H_out, W_out)

    o_ref[...] = out.astype(o_ref.dtype)


# ---------------------------------------------------------------------------
# VMEM planning helpers (padded tile footprints).
# ---------------------------------------------------------------------------
def _round_up(x: int, m: int) -> int:
    return ((x + m - 1) // m) * m


def _sublane_pack(itemsize: int) -> int:
    # 8 sublanes for 32-bit, 16 for 16-bit, 32 for 8-bit dtypes.
    return max(8, 32 // max(int(itemsize), 1))


def _padded_tile_bytes(rows: int, cols: int, dtype) -> int:
    """Bytes of a (rows, cols) VMEM tile after (sublane, 128-lane) padding."""
    itemsize = jnp.dtype(dtype).itemsize
    return _round_up(rows, _sublane_pack(itemsize)) * _round_up(cols, 128) * itemsize


def _vmem_budget_and_limit():
    """(working budget, vmem_limit_bytes) chosen per TPU generation."""
    cap = None
    try:
        info = pltpu.get_tpu_info()
        cap = int(getattr(info, "vmem_capacity_bytes", 0)) or None
    except Exception:
        cap = None
    if cap is None:
        cap = 64 * 1024 * 1024          # conservative: assume v7x-sized VMEM
    if cap >= 96 * 1024 * 1024:         # v5e / v6e: 128 MiB VMEM
        return 56 * 1024 * 1024, 100 * 1024 * 1024
    return 24 * 1024 * 1024, 48 * 1024 * 1024    # v7x: 64 MiB per TensorCore


# ---------------------------------------------------------------------------
# Module wrapper.
# ---------------------------------------------------------------------------
class Interpolate:
    """JAX/Pallas equivalent of the PyTorch Interpolate wrapper (bilinear)."""

    def __init__(self, size=None, scale=None, mode='bilinear', align_corners=False):
        assert (size is None) == (scale is not None)
        assert mode == 'bilinear'  # TODO(synk): other interpolate modes not implemented
        self.size = size
        self.scale = scale
        self.mode = mode
        self.align_corners = align_corners

    def __call__(self, x: jnp.ndarray) -> jnp.ndarray:
        N, C, H_in, W_in = x.shape
        if self.size is not None:
            size = self.size
            if isinstance(size, int):
                H_out, W_out = size, size
            else:
                H_out, W_out = int(size[0]), int(size[1])
        else:
            scale = self.scale
            if isinstance(scale, (tuple, list)):
                sh, sw = float(scale[0]), float(scale[1])
            else:
                sh = sw = float(scale)
            H_out, W_out = int(H_in * sh), int(W_in * sw)

        dtype = x.dtype
        wh, wwt = _cached_weights(H_in, W_in, H_out, W_out,
                                  bool(self.align_corners), jnp.dtype(dtype).name)

        NC = N * C
        x_flat = x.reshape(NC, H_in, W_in)

        # ---- choose the per-step plane batch B against a padded VMEM model ----
        budget, vmem_limit = _vmem_budget_and_limit()

        x_plane = _padded_tile_bytes(H_in, W_in, dtype)
        out_plane = _padded_tile_bytes(H_out, W_out, dtype)
        t_f32 = _round_up(H_in, 8) * _round_up(W_out, 128) * 4        # flat f32 W-interp result
        t_cast = _padded_tile_bytes(H_in, W_out, dtype)               # cast/reshape copy
        whb_plane = _padded_tile_bytes(H_out, H_in, dtype)            # materialized Wh broadcast
        o_f32 = _padded_tile_bytes(H_out, W_out, jnp.float32)         # f32 einsum result

        per_plane = (2 * x_plane          # x block (double-buffered)
                     + 2 * out_plane      # out block (double-buffered)
                     + t_f32 + t_cast + whb_plane + o_f32)

        # Grid-invariant weights are still double-buffered by the default pipeline.
        weight_bytes = 2 * (_padded_tile_bytes(H_out, H_in, dtype)
                            + _padded_tile_bytes(W_in, W_out, dtype))

        cap_budget = max(1, (budget - weight_bytes) // max(per_plane, 1))
        cap_target = max(1, (4 * 1024 * 1024) // max(x_plane, 1))     # ~4 MiB x block
        B = int(max(1, min(cap_budget, cap_target, NC)))
        if NC >= 2:
            # Keep >= 2 grid steps so both v7x TensorCores get work.
            B = min(B, (NC + 1) // 2)

        num_steps = (NC + B - 1) // B
        NC_pad = num_steps * B
        if NC_pad != NC:
            # Pad with dummy planes instead of collapsing B (divisor rule removed).
            x_flat = jnp.pad(x_flat, ((0, NC_pad - NC), (0, 0), (0, 0)))

        out_flat = pl.pallas_call(
            _bilinear_kernel,
            out_shape=jax.ShapeDtypeStruct((NC_pad, H_out, W_out), dtype),
            grid_spec=pltpu.PrefetchScalarGridSpec(
                num_scalar_prefetch=0,
                grid=(num_steps,),
                in_specs=[
                    pl.BlockSpec((B, H_in, W_in), lambda i: (i, 0, 0)),
                    pl.BlockSpec((H_out, H_in), lambda i: (0, 0)),
                    pl.BlockSpec((W_in, W_out), lambda i: (0, 0)),
                ],
                out_specs=pl.BlockSpec((B, H_out, W_out), lambda i: (i, 0, 0)),
            ),
            compiler_params=pltpu.CompilerParams(
                dimension_semantics=("parallel",),
                vmem_limit_bytes=vmem_limit,
            ),
        )(x_flat, wh, wwt)

        return out_flat[:NC].reshape(N, C, H_out, W_out)


if __name__ == "__main__":
    key = jax.random.PRNGKey(0)
    N, C, H, W = 2, 4, 16, 16
    x = jax.random.normal(key, (N, C, H, W), dtype=jnp.float32)

    # scale_factor=2 upsampling, bilinear, align_corners=False (PyTorch defaults)
    interp = Interpolate(scale=2, mode='bilinear', align_corners=False)
    out = interp(x)
    out = jax.block_until_ready(out)

    assert out.shape == (N, C, 2 * H, 2 * W), out.shape

    # Pure-JAX reference using the same separable formulation.
    wh_ref = jnp.asarray(_interp_matrix_np(2 * H, H, False))
    ww_ref = jnp.asarray(_interp_matrix_np(2 * W, W, False))
    ref = jnp.einsum('oh,nchw,pw->ncop', wh_ref, x, ww_ref)
    assert jnp.allclose(out, ref, atol=1e-5, rtol=1e-5)

    print("KERNEL_OK")
</pallas_src>

<mosaic_0001>
module attributes {stable_mosaic.version = 11 : i64} {
  func.func @_bilinear_kernel(%arg0: i32, %arg1: memref<4x16x16xf32, #tpu.memory_space<vmem>>, %arg2: memref<32x16xf32, #tpu.memory_space<vmem>>, %arg3: memref<16x32xf32, #tpu.memory_space<vmem>>, %arg4: memref<4x32x32xf32, #tpu.memory_space<vmem>>) attributes {dimension_semantics = [#tpu.dimension_semantics<parallel>], iteration_bounds = array<i64: 2>, scalar_prefetch = 0 : i64, scratch_operands = 0 : i64, tpu.core_type = #tpu.core_type<tc>, window_params = [{transform_indices = @transform_0, window_bounds = array<i64: 4, 16, 16>}, {pipeline_mode = #tpu.pipeline_mode<synchronous>, transform_indices = @transform_1, window_bounds = array<i64: 32, 16>}, {pipeline_mode = #tpu.pipeline_mode<synchronous>, transform_indices = @transform_2, window_bounds = array<i64: 16, 32>}, {transform_indices = @transform_3, window_bounds = array<i64: 4, 32, 32>}]} {
    %c0 = arith.constant 0 : index
    %c0_0 = arith.constant 0 : index
    %c0_1 = arith.constant 0 : index
    %0 = vector.load %arg1[%c0, %c0_0, %c0_1] : memref<4x16x16xf32, #tpu.memory_space<vmem>>, vector<4x16x16xf32>
    %1 = vector.shape_cast %0 : vector<4x16x16xf32> to vector<64x16xf32>
    %c0_2 = arith.constant 0 : index
    %c0_3 = arith.constant 0 : index
    %2 = vector.load %arg3[%c0_2, %c0_3] : memref<16x32xf32, #tpu.memory_space<vmem>>, vector<16x32xf32>
    %cst = arith.constant dense<0.000000e+00> : vector<64x32xf32>
    %3 = tpu.matmul %1, %2, %cst {dimension_numbers = #tpu.dot_dimension_numbers<[1], [0], [0], [1], [0, 0, 1, 1], [], []>} : vector<64x16xf32>, vector<16x32xf32>, vector<64x32xf32> -> vector<64x32xf32>
    %4 = vector.shape_cast %3 : vector<64x32xf32> to vector<4x16x32xf32>
    %c0_4 = arith.constant 0 : index
    %c0_5 = arith.constant 0 : index
    %5 = vector.load %arg2[%c0_4, %c0_5] : memref<32x16xf32, #tpu.memory_space<vmem>>, vector<32x16xf32>
    %6 = vector.shape_cast %5 : vector<32x16xf32> to vector<1x32x16xf32>
    %7 = vector.broadcast %6 : vector<1x32x16xf32> to vector<4x32x16xf32>
    "tpu.trace_start"() <{level = 10 : i32, message = "boh,bhw->bow"}> : () -> ()
    %cst_6 = arith.constant dense<0.000000e+00> : vector<4x32x32xf32>
    %8 = tpu.matmul %7, %4, %cst_6 {dimension_numbers = #tpu.dot_dimension_numbers<[2], [1], [1], [2], [0, 0, 0, 1, 1, 2], [0], [0]>} : vector<4x32x16xf32>, vector<4x16x32xf32>, vector<4x32x32xf32> -> vector<4x32x32xf32>
    "tpu.trace_stop"() : () -> ()
    %c0_7 = arith.constant 0 : index
    %c0_8 = arith.constant 0 : index
    %c0_9 = arith.constant 0 : index
    %9 = vector.load %arg4[%c0_7, %c0_8, %c0_9] : memref<4x32x32xf32, #tpu.memory_space<vmem>>, vector<4x32x32xf32>
    tpu.vector_store %arg4[%c0_7, %c0_8, %c0_9], %8 {strides = array<i32>} : memref<4x32x32xf32, #tpu.memory_space<vmem>>, vector<4x32x32xf32>,
    return
  }
  func.func @transform_0(%arg0: i32) -> (i32, i32, i32) {
    %c0_i32 = arith.constant 0 : i32
    %c0_i32_0 = arith.constant 0 : i32
    %c0_i32_1 = arith.constant 0 : i32
    return %arg0, %c0_i32, %c0_i32_0 : i32, i32, i32
  }
  func.func @transform_1(%arg0: i32) -> (i32, i32) {
    %c0_i32 = arith.constant 0 : i32
    %c0_i32_0 = arith.constant 0 : i32
    %c0_i32_1 = arith.constant 0 : i32
    return %c0_i32, %c0_i32_0 : i32, i32
  }
  func.func @transform_2(%arg0: i32) -> (i32, i32) {
    %c0_i32 = arith.constant 0 : i32
    %c0_i32_0 = arith.constant 0 : i32
    %c0_i32_1 = arith.constant 0 : i32
    return %c0_i32, %c0_i32_0 : i32, i32
  }
  func.func @transform_3(%arg0: i32) -> (i32, i32, i32) {
    %c0_i32 = arith.constant 0 : i32
    %c0_i32_0 = arith.constant 0 : i32
    %c0_i32_1 = arith.constant 0 : i32
    return %arg0, %c0_i32, %c0_i32_0 : i32, i32, i32
  }
}

</mosaic_0001>

<llo_original>
// kernel: tpu_custom_call.1
$region0: #{tpu_custom_call.1}
  #allocation0 [shape = 'u32[]', space=smem, size = 0x4, offset = 0x4, fixed_abs, tag = 'smem constant byte address 0x4 - core index']
  #allocation1 [shape = 'u32[144,128]{1,0:T(1,128)}', space=vmem, size = 0x12000, scoped, tag = 'internal scratch']
  %s0 = inlined_call_operand.hbm [shape: f32[8,16,16], index: 0, kind: input, shape index: {}]
  %s1 = inlined_call_operand.vmem [shape: f32[32,16], index: 1, kind: input, shape index: {}]
  %s2 = inlined_call_operand.vmem [shape: f32[16,32], index: 2, kind: input, shape index: {}]
  %s3 = inlined_call_operand.hbm [shape: f32[8,32,32], index: 3, kind: output, shape index: {}]
  %s4 = sld [smem:[#allocation0]]
  $region49: #{tpu_custom_call.1} parent=0
    _
  %s6 = ssub.s32 1, %s4
  %s7 = scalar_select 0, %s6, %s4
  $region1: #{tpu_custom_call.1} parent=0
    #allocation2 [shape = 'u8[65536]{0}', space=vmem, size = 0x10000, scoped, tag = 'input window, operand 0']
    #allocation3 [shape = 's32[2]{0}', space=sflag, size = 0x8, scoped, tag = 'scoped memory for tpu_custom_call.1']
    #allocation4 [shape = 's32[2]{0}', space=sflag, size = 0x8, scoped, tag = 'scoped memory for tpu_custom_call.1']
    #allocation5 [shape = 'u8[131072]{0}', space=vmem, size = 0x20000, scoped, tag = 'output window, operand 0']
    %8 = vsyncpa [#allocation3], 0
    %s9 = scalar_lea.sflag [#allocation3], 1
    %10 = vsyncpa %s9, 0
    %11 = vsyncpa [#allocation4], 0
    %s12 = scalar_lea.sflag [#allocation4], 1
    %13 = vsyncpa %s12, 0
    loop: start=0, step=1, limit=4
    $region2: #{tpu_custom_call.1} parent=1 // loop_pre_header
      _
    $region3: #{tpu_custom_call.1} parent=1 // loop_header
      %s15 = sphi 0, %s19
      %p16 = scmp.ge.s32.totalorder %s15, 4
      %s25 = sphi 0, %s27
      %s28 = sphi 0, %s25
      %s29 = sphi 0, %s28
      %s45 = sphi 0, %s29
      %s49 = sphi 0, %s49
      %s51 = sphi 0, %s49
      %s52 = sphi 0, %s51
      %s66 = sphi 0, %s52
      %s70 = sphi 0, %s70
      %s72 = sphi 0, %s70
      %s73 = sphi 0, %s72
      %s87 = sphi 0, %s73
      %s93 = sphi 0, %s95
      %s96 = sphi 0, %s93
      %s97 = sphi 0, %s96
      %s113 = sphi 0, %s97
    $region4: #{tpu_custom_call.1} parent=1 // loop_header_branch
      %18 = sbr.rel (%p16) target = $region8
    $region5: #{tpu_custom_call.1} parent=1 // loop_body
      %s20 = ssub.s32 %s15, 1
      %s21 = ssub.s32 %s15, 2
      %s22 = sadd.s32 %s15, 1
      %s23 = ssub.s32 %s15, %s22
      %p24 = scmp.eq.s32.totalorder %s23, 0
      %s26 = sadd.s32 %s25, 1
      %s27 = scalar_select %p24, %s25, %s26
      %p30 = pneg %p24
      %p31 = scmp.eq.s32.totalorder %s15, 1
      %p32 = por %p30, %p31
      %p33 = scmp.ne.s32.totalorder %s25, %s28
      %p34 = scmp.eq.s32.totalorder %s15, 0
      %p35 = por %p33, %p34
      %p36 = scmp.ne.s32.totalorder %s25, %s28
      %p37 = scmp.eq.s32.totalorder %s20, 1
      %p38 = por %p36, %p37
      %p39 = scmp.ne.s32.totalorder %s28, %s29
      %p40 = scmp.eq.s32.totalorder %s20, 0
      %p41 = por %p39, %p40
      %p42 = scmp.ne.s32.totalorder %s28, %s29
      %p43 = scmp.eq.s32.totalorder %s21, 1
      %p44 = por %p42, %p43
      %p46 = scmp.ne.s32.totalorder %s29, %s45
      %p47 = scmp.eq.s32.totalorder %s21, 0
      %p48 = por %p46, %p47
      %s50 = sadd.s32 %s49, 1
      %p53 = scmp.eq.s32.totalorder %s15, 1
      %p54 = scmp.ne.s32.totalorder %s49, %s51
      %p55 = scmp.eq.s32.totalorder %s15, 0
      %p56 = por %p54, %p55
      %p57 = scmp.ne.s32.totalorder %s49, %s51
      %p58 = scmp.eq.s32.totalorder %s20, 1
      %p59 = por %p57, %p58
      %p60 = scmp.ne.s32.totalorder %s51, %s52
      %p61 = scmp.eq.s32.totalorder %s20, 0
      %p62 = por %p60, %p61
      %p63 = scmp.ne.s32.totalorder %s51, %s52
      %p64 = scmp.eq.s32.totalorder %s21, 1
      %p65 = por %p63, %p64
      %p67 = scmp.ne.s32.totalorder %s52, %s66
      %p68 = scmp.eq.s32.totalorder %s21, 0
      %p69 = por %p67, %p68
      %s71 = sadd.s32 %s70, 1
      %p74 = scmp.eq.s32.totalorder %s15, 1
      %p75 = scmp.ne.s32.totalorder %s70, %s72
      %p76 = scmp.eq.s32.totalorder %s15, 0
      %p77 = por %p75, %p76
      %p78 = scmp.ne.s32.totalorder %s70, %s72
      %p79 = scmp.eq.s32.totalorder %s20, 1
      %p80 = por %p78, %p79
      %p81 = scmp.ne.s32.totalorder %s72, %s73
      %p82 = scmp.eq.s32.totalorder %s20, 0
      %p83 = por %p81, %p82
      %p84 = scmp.ne.s32.totalorder %s72, %s73
      %p85 = scmp.eq.s32.totalorder %s21, 1
      %p86 = por %p84, %p85
      %p88 = scmp.ne.s32.totalorder %s73, %s87
      %p89 = scmp.eq.s32.totalorder %s21, 0
      %p90 = por %p88, %p89
      %s91 = ssub.s32 %s15, %s22
      %p92 = scmp.eq.s32.totalorder %s91, 0
      %s94 = sadd.s32 %s93, 1
      %s95 = scalar_select %p92, %s93, %s94
      %p98 = pneg %p92
      %p99 = scmp.eq.s32.totalorder %s15, 1
      %p100 = por %p98, %p99
      %p101 = scmp.ne.s32.totalorder %s93, %s96
      %p102 = scmp.eq.s32.totalorder %s15, 0
      %p103 = por %p101, %p102
      %p104 = scmp.ne.s32.totalorder %s93, %s96
      %p105 = scmp.eq.s32.totalorder %s20, 1
      %p106 = por %p104, %p105
      %p107 = scmp.ne.s32.totalorder %s96, %s97
      %p108 = scmp.eq.s32.totalorder %s20, 0
      %p109 = por %p107, %p108
      %p110 = scmp.ne.s32.totalorder %s96, %s97
      %p111 = scmp.eq.s32.totalorder %s21, 1
      %p112 = por %p110, %p111
      %p114 = scmp.ne.s32.totalorder %s97, %s113
      %p115 = scmp.eq.s32.totalorder %s21, 0
      %p116 = por %p114, %p115
      %p117 = scmp.le.s32.totalorder 1, %s15
      %p118 = scmp.lt.s32.totalorder %s15, 3
      %p119 = pnand %p117, %p118
      %p120 = pneg %p119
      // Predicated region
      $region9: #{tpu_custom_call.1} parent=5 // pred_check
        _
      $region10: #{tpu_custom_call.1} parent=5 // pred_check_branch
        %122 = sbr.rel (%p119) target = $region12
      $region11: #{tpu_custom_call.1} parent=5 // pred_region
        %s123 = ssub.s32 %s15, 1
        // Predicated region
        $region13: #{tpu_custom_call.1} parent=11 // pred_check
          %p124 = pneg %p62
        $region14: #{tpu_custom_call.1} parent=11 // pred_check_branch
          %126 = sbr.rel (%p124) target = $region16
        $region15: #{tpu_custom_call.1} parent=11 // pred_region
          _
        $region16: #{tpu_custom_call.1} parent=11 // pred_fallthru
          _
        // Predicated region
        $region17: #{tpu_custom_call.1} parent=11 // pred_check
          %p127 = pneg %p83
        $region18: #{tpu_custom_call.1} parent=11 // pred_check_branch
          %129 = sbr.rel (%p127) target = $region20
        $region19: #{tpu_custom_call.1} parent=11 // pred_region
          _
        $region20: #{tpu_custom_call.1} parent=11 // pred_fallthru
          _
      $region12: #{tpu_custom_call.1} parent=5 // pred_fallthru
        _
      %p130 = scmp.lt.s32.totalorder %s15, 2
      // Predicated region
      $region21: #{tpu_custom_call.1} parent=5 // pred_check
        %p131 = pneg %p130
      $region22: #{tpu_custom_call.1} parent=5 // pred_check_branch
        %133 = sbr.rel (%p131) target = $region24
      $region23: #{tpu_custom_call.1} parent=5 // pred_region
        // Predicated region
        $region25: #{tpu_custom_call.1} parent=23 // pred_check
          %p134 = pneg %p35
        $region26: #{tpu_custom_call.1} parent=23 // pred_check_branch
          %136 = sbr.rel (%p134) target = $region28
        $region27: #{tpu_custom_call.1} parent=23 // pred_region
          %s137 = sand.u32 %s25, 1
          %s138 = scalar_lea.sflag [#allocation3], %s137
          %s139 = sand.u32 %s25, 1
          %s140 = smul.addr %s139, 64
          %s141 = scalar_lea.vmem [#allocation2], %s140
          %s142 = smul.u32 4, %s15
          %s144 = ssub.s32 1024, 1024
          %145 = vsyncadd %s138, %s144
          %s146 = smul.addr %s142, 2
          %s147 = smul.addr %s146, 128
          %s148 = scalar_lea.hbm %s0, %s147
          %s149 = sshll.u32 %s141, 4
          %s150 = int_to_ptr.vmem [resolvable:$true] %s149
          %155 = dma.hbm_to_vmem [thread:$0]  %s148, 1024, %s150, %s138, 128, 128, 8
        $region28: #{tpu_custom_call.1} parent=23 // pred_fallthru
          _
      $region24: #{tpu_custom_call.1} parent=5 // pred_fallthru
        _
      %p156 = scmp.le.s32.totalorder 1, %s15
      %p157 = scmp.lt.s32.totalorder %s15, 3
      %p158 = pnand %p156, %p157
      %p159 = pneg %p158
      // Predicated region
      $region29: #{tpu_custom_call.1} parent=5 // pred_check
        _
      $region30: #{tpu_custom_call.1} parent=5 // pred_check_branch
        %161 = sbr.rel (%p158) target = $region32
      $region31: #{tpu_custom_call.1} parent=5 // pred_region
        %s162 = ssub.s32 %s15, 1
        %s163 = sand.u32 %s28, 1
        %s164 = scalar_lea.sflag [#allocation3], %s163
        %s165 = sand.u32 %s28, 1
        %s166 = smul.addr %s165, 64
        %s167 = scalar_lea.vmem [#allocation2], %s166
        // Predicated region
        $region33: #{tpu_custom_call.1} parent=31 // pred_check
          %p168 = pneg %p41
        $region34: #{tpu_custom_call.1} parent=31 // pred_check_branch
          %170 = sbr.rel (%p168) target = $region36
        $region35: #{tpu_custom_call.1} parent=31 // pred_region
          %171 = dma.done %s164, 1024
        $region36: #{tpu_custom_call.1} parent=31 // pred_fallthru
          _
        %s172 = sand.u32 %s28, 1
        %s173 = scalar_lea.sflag [#allocation3], %s172
        %s174 = sand.u32 %s28, 1
        %s175 = smul.addr %s174, 64
        %s176 = scalar_lea.vmem [#allocation2], %s175
        %p177 = pneg %p41
        %p178 = pneg %p38
        %p179 = pneg %p62
        %p180 = pneg %p59
        %p181 = pneg %p83
        %p182 = pneg %p80
        %p183 = pneg %p109
        %p184 = pneg %p106
        %s185 = sand.u32 %s96, 1
        %s186 = scalar_lea.sflag [#allocation4], %s185
        %s187 = sand.u32 %s96, 1
        %s188 = smul.addr %s187, 128
        %s189 = scalar_lea.vmem [#allocation5], %s188
        %s190 = smul.u32 4, %s20
        %s191 = smul.u32 4, %s20
        %v192 = vld [vmem:[%s167] sm:$0xff]
        %v193 = vld [vmem:[%s167 + $0x8] sm:$0xff]
        %v194 = vld [vmem:[%s167 + $0x10] sm:$0xff]
        %v195 = vld [vmem:[%s167 + $0x18] sm:$0xff]
        %v196 = vld [vmem:[%s167 + $0x20] sm:$0xff]
        %v197 = vld [vmem:[%s167 + $0x28] sm:$0xff]
        %v198 = vld [vmem:[%s167 + $0x30] sm:$0xff]
        %v199 = vld [vmem:[%s167 + $0x38] sm:$0xff]
        %v200 = vld [vmem:[%s2] sm:$0xff]
        %v201 = vld [vmem:[%s2 + $0x8] sm:$0xff]
        %vm202 = vcmask 130048
        %v204 = vsel %vm202, %v192, 0
        %v207 = vsel %vm202, %v193, 0
        %v210 = vsel %vm202, %v194, 0
        %v213 = vsel %vm202, %v195, 0
        %v216 = vsel %vm202, %v196, 0
        %v219 = vsel %vm202, %v197, 0
        %v222 = vsel %vm202, %v198, 0
        %v225 = vsel %vm202, %v199, 0
        %227 = vmatprep.subr.mxu0 0.0
        %228 = vmatpush1.msra.mxu0 %v200
        %229 = vmatprep.subr.mxu0 0.0
        %230 = vmatpush1.msra.mxu0 %v201
        %231 = vmatprep.subr.mxu0 0.0
        %232 = vmatpush1.msra.mxu0 0.0
        %233 = vmatprep.subr.mxu0 0.0
        %234 = vmatpush1.msra.mxu0 0.0
        %235 = vmatprep.subr.mxu0 0.0
        %236 = vmatpush1.msra.mxu0 0.0
        %237 = vmatprep.subr.mxu0 0.0
        %238 = vmatpush1.msra.mxu0 0.0
        %239 = vmatprep.subr.mxu0 0.0
        %240 = vmatpush1.msra.mxu0 0.0
        %241 = vmatprep.subr.mxu0 0.0
        %242 = vmatpush1.msra.mxu0 0.0
        %243 = vmatprep.subr.mxu0 0.0
        %244 = vmatpush1.msra.mxu0 0.0
        %245 = vmatprep.subr.mxu0 0.0
        %246 = vmatpush1.msra.mxu0 0.0
        %247 = vmatprep.subr.mxu0 0.0
        %248 = vmatpush1.msra.mxu0 0.0
        %249 = vmatprep.subr.mxu0 0.0
        %250 = vmatpush1.msra.mxu0 0.0
        %251 = vmatprep.subr.mxu0 0.0
        %252 = vmatpush1.msra.mxu0 0.0
        %253 = vmatprep.subr.mxu0 0.0
        %254 = vmatpush1.msra.mxu0 0.0
        %255 = vmatprep.subr.mxu0 0.0
        %256 = vmatpush1.msra.mxu0 0.0
        %257 = vmatprep.subr.mxu0 0.0
        %258 = vmatpush1.msra.mxu0 0.0
        %259 = vmatprep.subr.mxu0 0.0
        %260 = vmatpush1.msra.mxu0 0.0
        %261 = vmatprep.subr.mxu0 0.0
        %262 = vmatpush1.msra.mxu0 0.0
        %263 = vmatprep.subr.mxu0 0.0
        %264 = vmatpush1.msra.mxu0 0.0
        %265 = vmatprep.subr.mxu0 0.0
        %266 = vmatpush1.msra.mxu0 0.0
        %267 = vmatprep.subr.mxu0 0.0
        %268 = vmatpush1.msra.mxu0 0.0
        %269 = vmatprep.subr.mxu0 0.0
        %270 = vmatpush1.msra.mxu0 0.0
        %271 = vmatprep.subr.mxu0 0.0
        %272 = vmatpush1.msra.mxu0 0.0
        %273 = vmatprep.subr.mxu0 0.0
        %274 = vmatpush1.msra.mxu0 0.0
        %275 = vmatprep.subr.mxu0 0.0
        %276 = vmatpush1.msra.mxu0 0.0
        %277 = vmatprep.subr.mxu0 0.0
        %278 = vmatpush1.msra.mxu0 0.0
        %279 = vmatprep.subr.mxu0 0.0
        %280 = vmatpush1.msra.mxu0 0.0
        %281 = vmatprep.subr.mxu0 0.0
        %282 = vmatpush1.msra.mxu0 0.0
        %283 = vmatprep.subr.mxu0 0.0
        %284 = vmatpush1.msra.mxu0 0.0
        %285 = vmatprep.subr.mxu0 0.0
        %286 = vmatpush1.msra.mxu0 0.0
        %287 = vmatprep.subr.mxu0 0.0
        %288 = vmatpush1.msra.mxu0 0.0
        %289 = vmatprep.subr.mxu0 0.0
        %290 = vmatpush1.msra.mxu0 0.0
        %291 = vmatprep.mubr.f32.mxu0 0.0
        %292 = vmatmul.mubr.f32.gmra.mrb[0].mxu0 %v204
        %v293 = vpop.f32.mrb[0].mxu0
        %v294 = vadd.f32 0.0, %v293
        %v295 = vpop.f32.mrb[0].mxu0
        %296 = vmatprep.mubr.f32.mxu0 0.0
        %297 = vmatmul.mubr.f32.gmra.mrb[0].mxu0 %v207
        %v298 = vpop.f32.mrb[0].mxu0
        %v299 = vadd.f32 0.0, %v298
        %v300 = vpop.f32.mrb[0].mxu0
        %301 = vmatprep.mubr.f32.mxu0 0.0
        %302 = vmatmul.mubr.f32.gmra.mrb[0].mxu0 %v210
        %v303 = vpop.f32.mrb[0].mxu0
        %v304 = vadd.f32 0.0, %v303
        %v305 = vpop.f32.mrb[0].mxu0
        %306 = vmatprep.mubr.f32.mxu0 0.0
        %307 = vmatmul.mubr.f32.gmra.mrb[0].mxu0 %v213
        %v308 = vpop.f32.mrb[0].mxu0
        %v309 = vadd.f32 0.0, %v308
        %v310 = vpop.f32.mrb[0].mxu0
        %311 = vmatprep.mubr.f32.mxu0 0.0
        %312 = vmatmul.mubr.f32.gmra.mrb[0].mxu0 %v216
        %v313 = vpop.f32.mrb[0].mxu0
        %v314 = vadd.f32 0.0, %v313
        %v315 = vpop.f32.mrb[0].mxu0
        %316 = vmatprep.mubr.f32.mxu0 0.0
        %317 = vmatmul.mubr.f32.gmra.mrb[0].mxu0 %v219
        %v318 = vpop.f32.mrb[0].mxu0
        %v319 = vadd.f32 0.0, %v318
        %v320 = vpop.f32.mrb[0].mxu0
        %321 = vmatprep.mubr.f32.mxu0 0.0
        %322 = vmatmul.mubr.f32.gmra.mrb[0].mxu0 %v222
        %v323 = vpop.f32.mrb[0].mxu0
        %v324 = vadd.f32 0.0, %v323
        %v325 = vpop.f32.mrb[0].mxu0
        %326 = vmatprep.mubr.f32.mxu0 0.0
        %327 = vmatmul.mubr.f32.gmra.mrb[0].mxu0 %v225
        %v328 = vpop.f32.mrb[0].mxu0
        %v329 = vadd.f32 0.0, %v328
        %v330 = vpop.f32.mrb[0].mxu0
        %331 = vdwg.mxu0
        %v332 = vld [vmem:[%s1] sm:$0xff]
        %v333 = vld [vmem:[%s1 + $0x8] sm:$0xff]
        %v334 = vld [vmem:[%s1 + $0x10] sm:$0xff]
        %v335 = vld [vmem:[%s1 + $0x18] sm:$0xff]
        %v337 = vsel %vm202, %v332, 0
        %v340 = vsel %vm202, %v333, 0
        %v343 = vsel %vm202, %v334, 0
        %v346 = vsel %vm202, %v335, 0
        %348 = vmatprep.subr.mxu0 0.0
        %349 = vmatpush1.msra.mxu0 %v294
        %350 = vmatprep.subr.mxu0 0.0
        %351 = vmatpush1.msra.mxu0 %v299
        %352 = vmatprep.subr.mxu0 0.0
        %353 = vmatpush1.msra.mxu0 0.0
        %354 = vmatprep.subr.mxu0 0.0
        %355 = vmatpush1.msra.mxu0 0.0
        %356 = vmatprep.subr.mxu0 0.0
        %357 = vmatpush1.msra.mxu0 0.0
        %358 = vmatprep.subr.mxu0 0.0
        %359 = vmatpush1.msra.mxu0 0.0
        %360 = vmatprep.subr.mxu0 0.0
        %361 = vmatpush1.msra.mxu0 0.0
        %362 = vmatprep.subr.mxu0 0.0
        %363 = vmatpush1.msra.mxu0 0.0
        %364 = vmatprep.subr.mxu0 0.0
        %365 = vmatpush1.msra.mxu0 0.0
        %366 = vmatprep.subr.mxu0 0.0
        %367 = vmatpush1.msra.mxu0 0.0
        %368 = vmatprep.subr.mxu0 0.0
        %369 = vmatpush1.msra.mxu0 0.0
        %370 = vmatprep.subr.mxu0 0.0
        %371 = vmatpush1.msra.mxu0 0.0
        %372 = vmatprep.subr.mxu0 0.0
        %373 = vmatpush1.msra.mxu0 0.0
        %374 = vmatprep.subr.mxu0 0.0
        %375 = vmatpush1.msra.mxu0 0.0
        %376 = vmatprep.subr.mxu0 0.0
        %377 = vmatpush1.msra.mxu0 0.0
        %378 = vmatprep.subr.mxu0 0.0
        %379 = vmatpush1.msra.mxu0 0.0
        %380 = vmatprep.subr.mxu0 0.0
        %381 = vmatpush1.msra.mxu0 0.0
        %382 = vmatprep.subr.mxu0 0.0
        %383 = vmatpush1.msra.mxu0 0.0
        %384 = vmatprep.subr.mxu0 0.0
        %385 = vmatpush1.msra.mxu0 0.0
        %386 = vmatprep.subr.mxu0 0.0
        %387 = vmatpush1.msra.mxu0 0.0
        %388 = vmatprep.subr.mxu0 0.0
        %389 = vmatpush1.msra.mxu0 0.0
        %390 = vmatprep.subr.mxu0 0.0
        %391 = vmatpush1.msra.mxu0 0.0
        %392 = vmatprep.subr.mxu0 0.0
        %393 = vmatpush1.msra.mxu0 0.0
        %394 = vmatprep.subr.mxu0 0.0
        %395 = vmatpush1.msra.mxu0 0.0
        %396 = vmatprep.subr.mxu0 0.0
        %397 = vmatpush1.msra.mxu0 0.0
        %398 = vmatprep.subr.mxu0 0.0
        %399 = vmatpush1.msra.mxu0 0.0
        %400 = vmatprep.subr.mxu0 0.0
        %401 = vmatpush1.msra.mxu0 0.0
        %402 = vmatprep.subr.mxu0 0.0
        %403 = vmatpush1.msra.mxu0 0.0
        %404 = vmatprep.subr.mxu0 0.0
        %405 = vmatpush1.msra.mxu0 0.0
        %406 = vmatprep.subr.mxu0 0.0
        %407 = vmatpush1.msra.mxu0 0.0
        %408 = vmatprep.subr.mxu0 0.0
        %409 = vmatpush1.msra.mxu0 0.0
        %410 = vmatprep.subr.mxu0 0.0
        %411 = vmatpush1.msra.mxu0 0.0
        %412 = vmatprep.mubr.f32.mxu0 0.0
        %413 = vmatmul.mubr.f32.gmra.mrb[0].mxu0 %v337
        %v414 = vpop.f32.mrb[0].mxu0
        %v415 = vadd.f32 0.0, %v414
        %v416 = vpop.f32.mrb[0].mxu0
        %417 = vmatprep.mubr.f32.mxu0 0.0
        %418 = vmatmul.mubr.f32.gmra.mrb[0].mxu0 %v340
        %v419 = vpop.f32.mrb[0].mxu0
        %v420 = vadd.f32 0.0, %v419
        %v421 = vpop.f32.mrb[0].mxu0
        %422 = vmatprep.mubr.f32.mxu0 0.0
        %423 = vmatmul.mubr.f32.gmra.mrb[0].mxu0 %v343
        %v424 = vpop.f32.mrb[0].mxu0
        %v425 = vadd.f32 0.0, %v424
        %v426 = vpop.f32.mrb[0].mxu0
        %427 = vmatprep.mubr.f32.mxu0 0.0
        %428 = vmatmul.mubr.f32.gmra.mrb[0].mxu0 %v346
        %v429 = vpop.f32.mrb[0].mxu0
        %v430 = vadd.f32 0.0, %v429
        %v431 = vpop.f32.mrb[0].mxu0
        %432 = vdwg.mxu0
        %433 = vmatprep.subr.mxu0 0.0
        %434 = vmatpush1.msra.mxu0 %v304
        %435 = vmatprep.subr.mxu0 0.0
        %436 = vmatpush1.msra.mxu0 %v309
        %437 = vmatprep.subr.mxu0 0.0
        %438 = vmatpush1.msra.mxu0 0.0
        %439 = vmatprep.subr.mxu0 0.0
        %440 = vmatpush1.msra.mxu0 0.0
        %441 = vmatprep.subr.mxu0 0.0
        %442 = vmatpush1.msra.mxu0 0.0
        %443 = vmatprep.subr.mxu0 0.0
        %444 = vmatpush1.msra.mxu0 0.0
        %445 = vmatprep.subr.mxu0 0.0
        %446 = vmatpush1.msra.mxu0 0.0
        %447 = vmatprep.subr.mxu0 0.0
        %448 = vmatpush1.msra.mxu0 0.0
        %449 = vmatprep.subr.mxu0 0.0
        %450 = vmatpush1.msra.mxu0 0.0
        %451 = vmatprep.subr.mxu0 0.0
        %452 = vmatpush1.msra.mxu0 0.0
        %453 = vmatprep.subr.mxu0 0.0
        %454 = vmatpush1.msra.mxu0 0.0
        %455 = vmatprep.subr.mxu0 0.0
        %456 = vmatpush1.msra.mxu0 0.0
        %457 = vmatprep.subr.mxu0 0.0
        %458 = vmatpush1.msra.mxu0 0.0
        %459 = vmatprep.subr.mxu0 0.0
        %460 = vmatpush1.msra.mxu0 0.0
        %461 = vmatprep.subr.mxu0 0.0
        %462 = vmatpush1.msra.mxu0 0.0
        %463 = vmatprep.subr.mxu0 0.0
        %464 = vmatpush1.msra.mxu0 0.0
        %465 = vmatprep.subr.mxu0 0.0
        %466 = vmatpush1.msra.mxu0 0.0
        %467 = vmatprep.subr.mxu0 0.0
        %468 = vmatpush1.msra.mxu0 0.0
        %469 = vmatprep.subr.mxu0 0.0
        %470 = vmatpush1.msra.mxu0 0.0
        %471 = vmatprep.subr.mxu0 0.0
        %472 = vmatpush1.msra.mxu0 0.0
        %473 = vmatprep.subr.mxu0 0.0
        %474 = vmatpush1.msra.mxu0 0.0
        %475 = vmatprep.subr.mxu0 0.0
        %476 = vmatpush1.msra.mxu0 0.0
        %477 = vmatprep.subr.mxu0 0.0
        %478 = vmatpush1.msra.mxu0 0.0
        %479 = vmatprep.subr.mxu0 0.0
        %480 = vmatpush1.msra.mxu0 0.0
        %481 = vmatprep.subr.mxu0 0.0
        %482 = vmatpush1.msra.mxu0 0.0
        %483 = vmatprep.subr.mxu0 0.0
        %484 = vmatpush1.msra.mxu0 0.0
        %485 = vmatprep.subr.mxu0 0.0
        %486 = vmatpush1.msra.mxu0 0.0
        %487 = vmatprep.subr.mxu0 0.0
        %488 = vmatpush1.msra.mxu0 0.0
        %489 = vmatprep.subr.mxu0 0.0
        %490 = vmatpush1.msra.mxu0 0.0
        %491 = vmatprep.subr.mxu0 0.0
        %492 = vmatpush1.msra.mxu0 0.0
        %493 = vmatprep.subr.mxu0 0.0
        %494 = vmatpush1.msra.mxu0 0.0
        %495 = vmatprep.subr.mxu0 0.0
        %496 = vmatpush1.msra.mxu0 0.0
        %497 = vmatprep.mubr.f32.mxu0 0.0
        %498 = vmatmul.mubr.f32.gmra.mrb[0].mxu0 %v337
        %v499 = vpop.f32.mrb[0].mxu0
        %v500 = vadd.f32 0.0, %v499
        %v501 = vpop.f32.mrb[0].mxu0
        %502 = vmatprep.mubr.f32.mxu0 0.0
        %503 = vmatmul.mubr.f32.gmra.mrb[0].mxu0 %v340
        %v504 = vpop.f32.mrb[0].mxu0
        %v505 = vadd.f32 0.0, %v504
        %v506 = vpop.f32.mrb[0].mxu0
        %507 = vmatprep.mubr.f32.mxu0 0.0
        %508 = vmatmul.mubr.f32.gmra.mrb[0].mxu0 %v343
        %v509 = vpop.f32.mrb[0].mxu0
        %v510 = vadd.f32 0.0, %v509
        %v511 = vpop.f32.mrb[0].mxu0
        %512 = vmatprep.mubr.f32.mxu0 0.0
        %513 = vmatmul.mubr.f32.gmra.mrb[0].mxu0 %v346
        %v514 = vpop.f32.mrb[0].mxu0
        %v515 = vadd.f32 0.0, %v514
        %v516 = vpop.f32.mrb[0].mxu0
        %517 = vdwg.mxu0
        %518 = vmatprep.subr.mxu0 0.0
        %519 = vmatpush1.msra.mxu0 %v314
        %520 = vmatprep.subr.mxu0 0.0
        %521 = vmatpush1.msra.mxu0 %v319
        %522 = vmatprep.subr.mxu0 0.0
        %523 = vmatpush1.msra.mxu0 0.0
        %524 = vmatprep.subr.mxu0 0.0
        %525 = vmatpush1.msra.mxu0 0.0
        %526 = vmatprep.subr.mxu0 0.0
        %527 = vmatpush1.msra.mxu0 0.0
        %528 = vmatprep.subr.mxu0 0.0
        %529 = vmatpush1.msra.mxu0 0.0
        %530 = vmatprep.subr.mxu0 0.0
        %531 = vmatpush1.msra.mxu0 0.0
        %532 = vmatprep.subr.mxu0 0.0
        %533 = vmatpush1.msra.mxu0 0.0
        %534 = vmatprep.subr.mxu0 0.0
        %535 = vmatpush1.msra.mxu0 0.0
        %536 = vmatprep.subr.mxu0 0.0
        %537 = vmatpush1.msra.mxu0 0.0
        %538 = vmatprep.subr.mxu0 0.0
        %539 = vmatpush1.msra.mxu0 0.0
        %540 = vmatprep.subr.mxu0 0.0
        %541 = vmatpush1.msra.mxu0 0.0
        %542 = vmatprep.subr.mxu0 0.0
        %543 = vmatpush1.msra.mxu0 0.0
        %544 = vmatprep.subr.mxu0 0.0
        %545 = vmatpush1.msra.mxu0 0.0
        %546 = vmatprep.subr.mxu0 0.0
        %547 = vmatpush1.msra.mxu0 0.0
        %548 = vmatprep.subr.mxu0 0.0
        %549 = vmatpush1.msra.mxu0 0.0
        %550 = vmatprep.subr.mxu0 0.0
        %551 = vmatpush1.msra.mxu0 0.0
        %552 = vmatprep.subr.mxu0 0.0
        %553 = vmatpush1.msra.mxu0 0.0
        %554 = vmatprep.subr.mxu0 0.0
        %555 = vmatpush1.msra.mxu0 0.0
        %556 = vmatprep.subr.mxu0 0.0
        %557 = vmatpush1.msra.mxu0 0.0
        %558 = vmatprep.subr.mxu0 0.0
        %559 = vmatpush1.msra.mxu0 0.0
        %560 = vmatprep.subr.mxu0 0.0
        %561 = vmatpush1.msra.mxu0 0.0
        %562 = vmatprep.subr.mxu0 0.0
        %563 = vmatpush1.msra.mxu0 0.0
        %564 = vmatprep.subr.mxu0 0.0
        %565 = vmatpush1.msra.mxu0 0.0
        %566 = vmatprep.subr.mxu0 0.0
        %567 = vmatpush1.msra.mxu0 0.0
        %568 = vmatprep.subr.mxu0 0.0
        %569 = vmatpush1.msra.mxu0 0.0
        %570 = vmatprep.subr.mxu0 0.0
        %571 = vmatpush1.msra.mxu0 0.0
        %572 = vmatprep.subr.mxu0 0.0
        %573 = vmatpush1.msra.mxu0 0.0
        %574 = vmatprep.subr.mxu0 0.0
        %575 = vmatpush1.msra.mxu0 0.0
        %576 = vmatprep.subr.mxu0 0.0
        %577 = vmatpush1.msra.mxu0 0.0
        %578 = vmatprep.subr.mxu0 0.0
        %579 = vmatpush1.msra.mxu0 0.0
        %580 = vmatprep.subr.mxu0 0.0
        %581 = vmatpush1.msra.mxu0 0.0
        %582 = vmatprep.mubr.f32.mxu0 0.0
        %583 = vmatmul.mubr.f32.gmra.mrb[0].mxu0 %v337
        %v584 = vpop.f32.mrb[0].mxu0
        %v585 = vadd.f32 0.0, %v584
        %v586 = vpop.f32.mrb[0].mxu0
        %587 = vmatprep.mubr.f32.mxu0 0.0
        %588 = vmatmul.mubr.f32.gmra.mrb[0].mxu0 %v340
        %v589 = vpop.f32.mrb[0].mxu0
        %v590 = vadd.f32 0.0, %v589
        %v591 = vpop.f32.mrb[0].mxu0
        %592 = vmatprep.mubr.f32.mxu0 0.0
        %593 = vmatmul.mubr.f32.gmra.mrb[0].mxu0 %v343
        %v594 = vpop.f32.mrb[0].mxu0
        %v595 = vadd.f32 0.0, %v594
        %v596 = vpop.f32.mrb[0].mxu0
        %597 = vmatprep.mubr.f32.mxu0 0.0
        %598 = vmatmul.mubr.f32.gmra.mrb[0].mxu0 %v346
        %v599 = vpop.f32.mrb[0].mxu0
        %v600 = vadd.f32 0.0, %v599
        %v601 = vpop.f32.mrb[0].mxu0
        %602 = vdwg.mxu0
        %603 = vmatprep.subr.mxu0 0.0
        %604 = vmatpush1.msra.mxu0 %v324
        %605 = vmatprep.subr.mxu0 0.0
        %606 = vmatpush1.msra.mxu0 %v329
        %607 = vmatprep.subr.mxu0 0.0
        %608 = vmatpush1.msra.mxu0 0.0
        %609 = vmatprep.subr.mxu0 0.0
        %610 = vmatpush1.msra.mxu0 0.0
        %611 = vmatprep.subr.mxu0 0.0
        %612 = vmatpush1.msra.mxu0 0.0
        %613 = vmatprep.subr.mxu0 0.0
        %614 = vmatpush1.msra.mxu0 0.0
        %615 = vmatprep.subr.mxu0 0.0
        %616 = vmatpush1.msra.mxu0 0.0
        %617 = vmatprep.subr.mxu0 0.0
        %618 = vmatpush1.msra.mxu0 0.0
        %619 = vmatprep.subr.mxu0 0.0
        %620 = vmatpush1.msra.mxu0 0.0
        %621 = vmatprep.subr.mxu0 0.0
        %622 = vmatpush1.msra.mxu0 0.0
        %623 = vmatprep.subr.mxu0 0.0
        %624 = vmatpush1.msra.mxu0 0.0
        %625 = vmatprep.subr.mxu0 0.0
        %626 = vmatpush1.msra.mxu0 0.0
        %627 = vmatprep.subr.mxu0 0.0
        %628 = vmatpush1.msra.mxu0 0.0
        %629 = vmatprep.subr.mxu0 0.0
        %630 = vmatpush1.msra.mxu0 0.0
        %631 = vmatprep.subr.mxu0 0.0
        %632 = vmatpush1.msra.mxu0 0.0
        %633 = vmatprep.subr.mxu0 0.0
        %634 = vmatpush1.msra.mxu0 0.0
        %635 = vmatprep.subr.mxu0 0.0
        %636 = vmatpush1.msra.mxu0 0.0
        %637 = vmatprep.subr.mxu0 0.0
        %638 = vmatpush1.msra.mxu0 0.0
        %639 = vmatprep.subr.mxu0 0.0
        %640 = vmatpush1.msra.mxu0 0.0
        %641 = vmatprep.subr.mxu0 0.0
        %642 = vmatpush1.msra.mxu0 0.0
        %643 = vmatprep.subr.mxu0 0.0
        %644 = vmatpush1.msra.mxu0 0.0
        %645 = vmatprep.subr.mxu0 0.0
        %646 = vmatpush1.msra.mxu0 0.0
        %647 = vmatprep.subr.mxu0 0.0
        %648 = vmatpush1.msra.mxu0 0.0
        %649 = vmatprep.subr.mxu0 0.0
        %650 = vmatpush1.msra.mxu0 0.0
        %651 = vmatprep.subr.mxu0 0.0
        %652 = vmatpush1.msra.mxu0 0.0
        %653 = vmatprep.subr.mxu0 0.0
        %654 = vmatpush1.msra.mxu0 0.0
        %655 = vmatprep.subr.mxu0 0.0
        %656 = vmatpush1.msra.mxu0 0.0
        %657 = vmatprep.subr.mxu0 0.0
        %658 = vmatpush1.msra.mxu0 0.0
        %659 = vmatprep.subr.mxu0 0.0
        %660 = vmatpush1.msra.mxu0 0.0
        %661 = vmatprep.subr.mxu0 0.0
        %662 = vmatpush1.msra.mxu0 0.0
        %663 = vmatprep.subr.mxu0 0.0
        %664 = vmatpush1.msra.mxu0 0.0
        %665 = vmatprep.subr.mxu0 0.0
        %666 = vmatpush1.msra.mxu0 0.0
        %667 = vmatprep.mubr.f32.mxu0 0.0
        %668 = vmatmul.mubr.f32.gmra.mrb[0].mxu0 %v337
        %v669 = vpop.f32.mrb[0].mxu0
        %v670 = vadd.f32 0.0, %v669
        %v671 = vpop.f32.mrb[0].mxu0
        %672 = vmatprep.mubr.f32.mxu0 0.0
        %673 = vmatmul.mubr.f32.gmra.mrb[0].mxu0 %v340
        %v674 = vpop.f32.mrb[0].mxu0
        %v675 = vadd.f32 0.0, %v674
        %v676 = vpop.f32.mrb[0].mxu0
        %677 = vmatprep.mubr.f32.mxu0 0.0
        %678 = vmatmul.mubr.f32.gmra.mrb[0].mxu0 %v343
        %v679 = vpop.f32.mrb[0].mxu0
        %v680 = vadd.f32 0.0, %v679
        %v681 = vpop.f32.mrb[0].mxu0
        %682 = vmatprep.mubr.f32.mxu0 0.0
        %683 = vmatmul.mubr.f32.gmra.mrb[0].mxu0 %v346
        %v684 = vpop.f32.mrb[0].mxu0
        %v685 = vadd.f32 0.0, %v684
        %v686 = vpop.f32.mrb[0].mxu0
        %687 = vdwg.mxu0
        %vm688 = vcmask 261120
        %689 = vst.msk [vmem:[%s189] sm:$0xff] %vm688, %v415
        %690 = vst.msk [vmem:[%s189 + $0x8] sm:$0xff] %vm688, %v420
        %691 = vst.msk [vmem:[%s189 + $0x10] sm:$0xff] %vm688, %v425
        %692 = vst.msk [vmem:[%s189 + $0x18] sm:$0xff] %vm688, %v430
        %693 = vst.msk [vmem:[%s189 + $0x20] sm:$0xff] %vm688, %v500
        %694 = vst.msk [vmem:[%s189 + $0x28] sm:$0xff] %vm688, %v505
        %695 = vst.msk [vmem:[%s189 + $0x30] sm:$0xff] %vm688, %v510
        %696 = vst.msk [vmem:[%s189 + $0x38] sm:$0xff] %vm688, %v515
        %697 = vst.msk [vmem:[%s189 + $0x40] sm:$0xff] %vm688, %v585
        %698 = vst.msk [vmem:[%s189 + $0x48] sm:$0xff] %vm688, %v590
        %699 = vst.msk [vmem:[%s189 + $0x50] sm:$0xff] %vm688, %v595
        %700 = vst.msk [vmem:[%s189 + $0x58] sm:$0xff] %vm688, %v600
        %701 = vst.msk [vmem:[%s189 + $0x60] sm:$0xff] %vm688, %v670
        %702 = vst.msk [vmem:[%s189 + $0x68] sm:$0xff] %vm688, %v675
        %703 = vst.msk [vmem:[%s189 + $0x70] sm:$0xff] %vm688, %v680
        %704 = vst.msk [vmem:[%s189 + $0x78] sm:$0xff] %vm688, %v685
        %s705 = sand.u32 %s96, 1
        %s706 = scalar_lea.sflag [#allocation4], %s705
        %s707 = sand.u32 %s96, 1
        %s708 = smul.addr %s707, 128
        %s709 = scalar_lea.vmem [#allocation5], %s708
        // Predicated region
        $region37: #{tpu_custom_call.1} parent=31 // pred_check
          %p710 = pneg %p106
        $region38: #{tpu_custom_call.1} parent=31 // pred_check_branch
          %712 = sbr.rel (%p710) target = $region40
        $region39: #{tpu_custom_call.1} parent=31 // pred_region
          %s713 = smul.u32 4, %s20
          %s715 = ssub.s32 2048, 2048
          %716 = vsyncadd %s706, %s715
          %s717 = smul.addr %s713, 4
          %s718 = smul.addr %s717, 128
          %s719 = scalar_lea.hbm %s3, %s718
          %s720 = sshll.u32 %s709, 4
          %s721 = int_to_ptr.vmem [resolvable:$true] %s720
          %726 = dma.vmem_to_hbm [thread:$0]  %s721, 2048, %s719, %s706, 128, 128, 8
        $region40: #{tpu_custom_call.1} parent=31 // pred_fallthru
          _
      $region32: #{tpu_custom_call.1} parent=5 // pred_fallthru
        _
      %p727 = scmp.le.s32.totalorder 2, %s15
      // Predicated region
      $region41: #{tpu_custom_call.1} parent=5 // pred_check
        %p728 = pneg %p727
      $region42: #{tpu_custom_call.1} parent=5 // pred_check_branch
        %730 = sbr.rel (%p728) target = $region44
      $region43: #{tpu_custom_call.1} parent=5 // pred_region
        %s731 = ssub.s32 %s15, 2
        // Predicated region
        $region45: #{tpu_custom_call.1} parent=43 // pred_check
          %p732 = pneg %p112
        $region46: #{tpu_custom_call.1} parent=43 // pred_check_branch
          %734 = sbr.rel (%p732) target = $region48
        $region47: #{tpu_custom_call.1} parent=43 // pred_region
          %s735 = sand.u32 %s97, 1
          %s736 = scalar_lea.sflag [#allocation4], %s735
          %s737 = sand.u32 %s97, 1
          %s738 = smul.addr %s737, 128
          %s739 = scalar_lea.vmem [#allocation5], %s738
          %740 = dma.done %s736, 2048
        $region48: #{tpu_custom_call.1} parent=43 // pred_fallthru
          _
      $region44: #{tpu_custom_call.1} parent=5 // pred_fallthru
        _
    $region6: #{tpu_custom_call.1} parent=1 // loop_footer
      %s19 = sadd.s32 1, %s15
    $region7: #{tpu_custom_call.1} parent=1 // loop_footer_branch
      %14 = sbr.rel target = $region3
    $region8: #{tpu_custom_call.1} parent=1 // loop_exit
      _
    %741 = vsyncpa [#allocation3], 1
    %s742 = scalar_lea.sflag [#allocation3], 1
    %743 = vsyncpa %s742, 1
    %744 = vsyncpa [#allocation4], 1
    %s745 = scalar_lea.sflag [#allocation4], 1
    %746 = vsyncpa %s745, 1

</llo_original>
